<compile_context>
chip_gen: v7x
topology: tpu7x:2x2x1
jax: 0.10.0
libtpu: 0.0.40
codegen_flags: <defaults>
</compile_context>

<pallas_src>
import functools

import jax
import jax.numpy as jnp
from jax.experimental import pallas as pl
from jax.experimental.pallas import tpu as pltpu

V_SZ = 10
IN_DIM = 2 * V_SZ   # 20
HID_DIM = 128
OUT_DIM = 2

# Batch rows per grid step. Review guidance: 2048-8192; 4096 keeps
# (x tile + hidden activations) well under the default scoped-VMEM limit on
# all of v5e / v6e / v7x even with double buffering.
TILE_B_MAX = 4096


def _round_up(n, m):
    return (n + m - 1) // m * m


def _mlp_kernel(x_ref, w1_ref, b1_ref, w2t_ref, b2_ref, o_ref):
    """One batch tile: o = (fc2(relu(fc1(x))))^T  (lane-dense output block).

    x_ref  : (TILE_B, 20)  bf16   streamed per grid step
    w1_ref : (20, 128)     bf16   resident (constant index_map)
    b1_ref : (1, 128)      f32    resident
    w2t_ref: (2, 128)      bf16   resident (PyTorch (out, in) layout)
    b2_ref : (2, 1)        f32    resident
    o_ref  : (2, TILE_B)   f32    transposed -> last dim is lane-dense
    """
    # fc1 on the MXU: bf16 x bf16 -> f32 accumulation; bias + ReLU in f32.
    h = jnp.dot(x_ref[...], w1_ref[...], preferred_element_type=jnp.float32)
    h = jnp.maximum(h + b1_ref[...], 0.0)                      # (TILE_B, 128)

    # fc2 in transposed form so the stored block is (2, TILE_B): the XLU
    # transpose of the aligned (TILE_B, 128) f32 tile rides a separate VLIW
    # slot and is effectively free in this memory-bound kernel.
    h_t = h.T                                                  # (128, TILE_B)
    w2 = w2t_ref[...].astype(jnp.float32)                      # (2, 128) f32 epilogue
    out_t = jnp.dot(w2, h_t, preferred_element_type=jnp.float32)
    out_t = out_t + b2_ref[...]                                # (2, TILE_B)
    o_ref[...] = out_t.astype(o_ref.dtype)


@functools.partial(jax.jit, static_argnames=("tile_b_max",))
def mlp_forward(x, w1, b1, w2, b2, *, tile_b_max=TILE_B_MAX):
    """x: (B, 20); w1: (20, 128); b1: (128,); w2: (128, 2); b2: (2,).

    Weights stored as (in_features, out_features), i.e. transposed relative
    to PyTorch's nn.Linear. Returns (B, 2) float32.
    """
    B = x.shape[0]

    # Batch tiling: big lane/sublane-friendly tiles; pad the ragged tail.
    if B >= tile_b_max:
        tile_b = _round_up(tile_b_max, 128)   # keeps output blocks lane-dense
    else:
        tile_b = _round_up(max(B, 1), 16)     # single grid step; block == full dims
    b_pad = _round_up(B, tile_b)
    grid_b = b_pad // tile_b
    if b_pad != B:
        x = jnp.pad(x, ((0, b_pad - B), (0, 0)))

    # HBM-bandwidth-bound: feed x / weights as bf16; keep accumulation and
    # the bias+ReLU epilogue f32 (also safe on v5e, which has no bf16 VPU).
    x_bf = x.astype(jnp.bfloat16)
    w1_bf = w1.astype(jnp.bfloat16)
    w2t_bf = w2.T.astype(jnp.bfloat16)                       # (2, 128)
    b1_2d = b1.reshape(1, HID_DIM).astype(jnp.float32)
    b2_2d = b2.reshape(OUT_DIM, 1).astype(jnp.float32)

    flops = 2 * b_pad * (IN_DIM * HID_DIM + HID_DIM * OUT_DIM)
    bytes_accessed = (
        b_pad * IN_DIM * 2                    # x (bf16)
        + OUT_DIM * b_pad * 4                 # output (f32)
        + IN_DIM * HID_DIM * 2 + HID_DIM * 4  # fc1 params
        + OUT_DIM * HID_DIM * 2 + OUT_DIM * 4  # fc2 params
    )

    out_t = pl.pallas_call(
        _mlp_kernel,
        out_shape=jax.ShapeDtypeStruct((OUT_DIM, b_pad), jnp.float32),
        grid=(grid_b,),
        in_specs=[
            # x: streamed per batch tile (double-buffered by Pallas).
            pl.BlockSpec((tile_b, IN_DIM), lambda i: (i, 0)),
            # Parameters: constant index_map -> DMA'd once, stay VMEM-resident.
            pl.BlockSpec((IN_DIM, HID_DIM), lambda i: (0, 0)),
            pl.BlockSpec((1, HID_DIM), lambda i: (0, 0)),
            pl.BlockSpec((OUT_DIM, HID_DIM), lambda i: (0, 0)),
            pl.BlockSpec((OUT_DIM, 1), lambda i: (0, 0)),
        ],
        # Transposed output: last dim = batch tile -> unmasked lane-dense
        # stores and dense HBM writeback (vs. 2-of-128-lane masked vst.msk).
        out_specs=pl.BlockSpec((OUT_DIM, tile_b), lambda i: (0, i)),
        compiler_params=pltpu.CompilerParams(
            dimension_semantics=("parallel",),  # shard batch over v7x's 2 TCs
        ),
        cost_estimate=pl.CostEstimate(
            flops=flops, transcendentals=0, bytes_accessed=bytes_accessed),
    )(x_bf, w1_bf, b1_2d, w2t_bf, b2_2d)

    # Undo the in-kernel transpose (tiny (2, B) array) and drop tail padding.
    return out_t[:, :B].T


def init_params(key):
    """Deterministic init mimicking nn.Linear's uniform(-1/sqrt(fan_in), +)."""
    k1, k2, k3, k4 = jax.random.split(key, 4)
    bound1 = 1.0 / jnp.sqrt(IN_DIM)
    bound2 = 1.0 / jnp.sqrt(HID_DIM)
    # Stored as (in_features, out_features) — transpose of PyTorch's layout.
    w1 = jax.random.uniform(k1, (IN_DIM, HID_DIM), jnp.float32, -bound1, bound1)
    b1 = jax.random.uniform(k2, (HID_DIM,), jnp.float32, -bound1, bound1)
    w2 = jax.random.uniform(k3, (HID_DIM, OUT_DIM), jnp.float32, -bound2, bound2)
    b2 = jax.random.uniform(k4, (OUT_DIM,), jnp.float32, -bound2, bound2)
    return w1, b1, w2, b2


def mlp_reference_f32(x, w1, b1, w2, b2):
    """Pure f32 reference (torch semantics)."""
    hp = jax.lax.Precision.HIGHEST
    h = jnp.maximum(jnp.dot(x, w1, precision=hp) + b1, 0.0)
    return jnp.dot(h, w2, precision=hp) + b2


def mlp_reference_bf16(x, w1, b1, w2, b2):
    """Reference matching the kernel's numerics: bf16 x/weights, f32 math."""
    hp = jax.lax.Precision.HIGHEST
    xb = x.astype(jnp.bfloat16).astype(jnp.float32)
    w1b = w1.astype(jnp.bfloat16).astype(jnp.float32)
    w2b = w2.astype(jnp.bfloat16).astype(jnp.float32)
    h = jnp.maximum(jnp.dot(xb, w1b, precision=hp) + b1, 0.0)
    return jnp.dot(h, w2b, precision=hp) + b2


if __name__ == "__main__":
    key = jax.random.PRNGKey(0)
    kx, kp = jax.random.split(key)
    w1, b1, w2, b2 = init_params(kp)

    # Small demo shapes. B=37 exercises the ragged-tail padding path.
    B = 37
    x = jax.random.normal(kx, (B, IN_DIM), dtype=jnp.float32)
    out = mlp_forward(x, w1, b1, w2, b2)
    jax.block_until_ready(out)
    assert out.shape == (B, OUT_DIM)
    ref_match = mlp_reference_bf16(x, w1, b1, w2, b2)
    ref_f32 = mlp_reference_f32(x, w1, b1, w2, b2)
    assert jnp.allclose(out, ref_match, atol=1e-3, rtol=1e-3), "mismatch vs bf16-matched ref"
    assert jnp.allclose(out, ref_f32, atol=5e-2, rtol=5e-2), "mismatch vs f32 ref"

    # Multi-tile path (grid > 1) at a small size via a reduced tile cap:
    # exercises weight residency across grid steps and the blocked,
    # lane-dense (2, TILE_B) output indexing.
    B2 = 256
    x2 = jax.random.normal(kx, (B2, IN_DIM), dtype=jnp.float32)
    out2 = mlp_forward(x2, w1, b1, w2, b2, tile_b_max=128)
    jax.block_until_ready(out2)
    assert out2.shape == (B2, OUT_DIM)
    ref2 = mlp_reference_bf16(x2, w1, b1, w2, b2)
    assert jnp.allclose(out2, ref2, atol=1e-3, rtol=1e-3), "mismatch on multi-tile path"

    print("KERNEL_OK")
</pallas_src>

<mosaic_0001>
module attributes {stable_mosaic.version = 11 : i64} {
  func.func @_mlp_kernel(%arg0: i32, %arg1: memref<48x20xbf16, #tpu.memory_space<vmem>>, %arg2: memref<20x128xbf16, #tpu.memory_space<vmem>>, %arg3: memref<1x128xf32, #tpu.memory_space<vmem>>, %arg4: memref<2x128xbf16, #tpu.memory_space<vmem>>, %arg5: memref<2x1xf32, #tpu.memory_space<vmem>>, %arg6: memref<2x48xf32, #tpu.memory_space<vmem>>) attributes {dimension_semantics = [#tpu.dimension_semantics<parallel>], iteration_bounds = array<i64: 1>, scalar_prefetch = 0 : i64, scratch_operands = 0 : i64, tpu.core_type = #tpu.core_type<tc>, window_params = [{transform_indices = @transform_0, window_bounds = array<i64: 48, 20>}, {pipeline_mode = #tpu.pipeline_mode<synchronous>, transform_indices = @transform_1, window_bounds = array<i64: 20, 128>}, {pipeline_mode = #tpu.pipeline_mode<synchronous>, transform_indices = @transform_2, window_bounds = array<i64: 1, 128>}, {pipeline_mode = #tpu.pipeline_mode<synchronous>, transform_indices = @transform_3, window_bounds = array<i64: 2, 128>}, {pipeline_mode = #tpu.pipeline_mode<synchronous>, transform_indices = @transform_4, window_bounds = array<i64: 2, 1>}, {transform_indices = @transform_5, window_bounds = array<i64: 2, 48>}]} {
    %c0 = arith.constant 0 : index
    %c0_0 = arith.constant 0 : index
    %0 = vector.load %arg1[%c0, %c0_0] : memref<48x20xbf16, #tpu.memory_space<vmem>>, vector<48x20xbf16>
    %c0_1 = arith.constant 0 : index
    %c0_2 = arith.constant 0 : index
    %1 = vector.load %arg2[%c0_1, %c0_2] : memref<20x128xbf16, #tpu.memory_space<vmem>>, vector<20x128xbf16>
    %cst = arith.constant dense<0.000000e+00> : vector<48x128xf32>
    %2 = tpu.matmul %0, %1, %cst {dimension_numbers = #tpu.dot_dimension_numbers<[1], [0], [0], [1], [0, 0, 1, 1], [], []>} : vector<48x20xbf16>, vector<20x128xbf16>, vector<48x128xf32> -> vector<48x128xf32>
    %c0_3 = arith.constant 0 : index
    %c0_4 = arith.constant 0 : index
    %3 = vector.load %arg3[%c0_3, %c0_4] : memref<1x128xf32, #tpu.memory_space<vmem>>, vector<1x128xf32>
    %4 = vector.broadcast %3 : vector<1x128xf32> to vector<48x128xf32>
    %5 = arith.addf %2, %4 : vector<48x128xf32>
    %cst_5 = arith.constant 0.000000e+00 : f32
    %6 = vector.broadcast %cst_5 : f32 to vector<48x128xf32>
    %7 = arith.maximumf %5, %6 : vector<48x128xf32>
    %8 = tpu.transpose %7, [1, 0] : vector<48x128xf32> -> vector<128x48xf32>
    %c0_6 = arith.constant 0 : index
    %c0_7 = arith.constant 0 : index
    %9 = vector.load %arg4[%c0_6, %c0_7] : memref<2x128xbf16, #tpu.memory_space<vmem>>, vector<2x128xbf16>
    %10 = arith.extf %9 : vector<2x128xbf16> to vector<2x128xf32>
    %cst_8 = arith.constant dense<0.000000e+00> : vector<2x48xf32>
    %11 = tpu.matmul %10, %8, %cst_8 {dimension_numbers = #tpu.dot_dimension_numbers<[1], [0], [0], [1], [0, 0, 1, 1], [], []>} : vector<2x128xf32>, vector<128x48xf32>, vector<2x48xf32> -> vector<2x48xf32>
    %c0_9 = arith.constant 0 : index
    %c0_10 = arith.constant 0 : index
    %12 = vector.load %arg5[%c0_9, %c0_10] : memref<2x1xf32, #tpu.memory_space<vmem>>, vector<2x1xf32>
    %13 = vector.broadcast %12 : vector<2x1xf32> to vector<2x48xf32>
    %14 = arith.addf %11, %13 : vector<2x48xf32>
    %c0_11 = arith.constant 0 : index
    %c0_12 = arith.constant 0 : index
    %15 = vector.load %arg6[%c0_11, %c0_12] : memref<2x48xf32, #tpu.memory_space<vmem>>, vector<2x48xf32>
    tpu.vector_store %arg6[%c0_11, %c0_12], %14 {strides = array<i32>} : memref<2x48xf32, #tpu.memory_space<vmem>>, vector<2x48xf32>,
    return
  }
  func.func @transform_0(%arg0: i32) -> (i32, i32) {
    %c0_i32 = arith.constant 0 : i32
    %c0_i32_0 = arith.constant 0 : i32
    return %arg0, %c0_i32 : i32, i32
  }
  func.func @transform_1(%arg0: i32) -> (i32, i32) {
    %c0_i32 = arith.constant 0 : i32
    %c0_i32_0 = arith.constant 0 : i32
    %c0_i32_1 = arith.constant 0 : i32
    return %c0_i32, %c0_i32_0 : i32, i32
  }
  func.func @transform_2(%arg0: i32) -> (i32, i32) {
    %c0_i32 = arith.constant 0 : i32
    %c0_i32_0 = arith.constant 0 : i32
    %c0_i32_1 = arith.constant 0 : i32
    return %c0_i32, %c0_i32_0 : i32, i32
  }
  func.func @transform_3(%arg0: i32) -> (i32, i32) {
    %c0_i32 = arith.constant 0 : i32
    %c0_i32_0 = arith.constant 0 : i32
    %c0_i32_1 = arith.constant 0 : i32
    return %c0_i32, %c0_i32_0 : i32, i32
  }
  func.func @transform_4(%arg0: i32) -> (i32, i32) {
    %c0_i32 = arith.constant 0 : i32
    %c0_i32_0 = arith.constant 0 : i32
    %c0_i32_1 = arith.constant 0 : i32
    return %c0_i32, %c0_i32_0 : i32, i32
  }
  func.func @transform_5(%arg0: i32) -> (i32, i32) {
    %c0_i32 = arith.constant 0 : i32
    %c0_i32_0 = arith.constant 0 : i32
    return %c0_i32, %arg0 : i32, i32
  }
}

</mosaic_0001>

<llo_original>
// kernel: mlp_forward.1
$region0: #{mlp_forward.1}
  #allocation0 [shape = 'u32[]', space=smem, size = 0x4, offset = 0x4, fixed_abs, tag = 'smem constant byte address 0x4 - core index']
  #allocation1 [shape = 'u32[144,128]{1,0:T(1,128)}', space=vmem, size = 0x12000, scoped, tag = 'internal scratch']
  %s0 = inlined_call_operand.vmem [shape: bf16[48,20], index: 0, kind: input, shape index: {}]
  %s1 = inlined_call_operand.vmem [shape: bf16[20,128], index: 1, kind: input, shape index: {}]
  %s2 = inlined_call_operand.vmem [shape: f32[1,128], index: 2, kind: input, shape index: {}]
  %s3 = inlined_call_operand.vmem [shape: bf16[2,128], index: 3, kind: input, shape index: {}]
  %s4 = inlined_call_operand.vmem [shape: f32[2,1], index: 4, kind: input, shape index: {}]
  %s5 = inlined_call_operand.vmem [shape: f32[2,48], index: 5, kind: output, shape index: {}]
  %s6 = sld [smem:[#allocation0]]
  $region30: #{mlp_forward.1} parent=0
    _
  %s8 = ssub.s32 1, %s6
  %s9 = scalar_select 0, %s8, %s6
  // Predicated region
  $region2: #{mlp_forward.1} parent=0 // pred_check
    _
  $region3: #{mlp_forward.1} parent=0 // pred_check_branch
    %11 = sbr.rel (0) target = $region5
  $region4: #{mlp_forward.1} parent=0 // pred_region
    _
  $region5: #{mlp_forward.1} parent=0 // pred_fallthru
    _
  // Predicated region
  $region6: #{mlp_forward.1} parent=0 // pred_check
    _
  $region7: #{mlp_forward.1} parent=0 // pred_check_branch
    %13 = sbr.rel (0) target = $region9
  $region8: #{mlp_forward.1} parent=0 // pred_region
    _
  $region9: #{mlp_forward.1} parent=0 // pred_fallthru
    _
  // Predicated region
  $region10: #{mlp_forward.1} parent=0 // pred_check
    _
  $region11: #{mlp_forward.1} parent=0 // pred_check_branch
    %15 = sbr.rel (0) target = $region13
  $region12: #{mlp_forward.1} parent=0 // pred_region
    _
  $region13: #{mlp_forward.1} parent=0 // pred_fallthru
    _
  // Predicated region
  $region14: #{mlp_forward.1} parent=0 // pred_check
    _
  $region15: #{mlp_forward.1} parent=0 // pred_check_branch
    %17 = sbr.rel (0) target = $region17
  $region16: #{mlp_forward.1} parent=0 // pred_region
    _
  $region17: #{mlp_forward.1} parent=0 // pred_fallthru
    _
  // Predicated region
  $region18: #{mlp_forward.1} parent=0 // pred_check
    _
  $region19: #{mlp_forward.1} parent=0 // pred_check_branch
    %19 = sbr.rel (0) target = $region21
  $region20: #{mlp_forward.1} parent=0 // pred_region
    _
  $region21: #{mlp_forward.1} parent=0 // pred_fallthru
    _
  %v21 = vld [vmem:[%s0] sm:$0xf]
  %v22 = vld [vmem:[%s0 + $0x4] sm:$0xf]
  %v23 = vld [vmem:[%s0 + $0x8] sm:$0xf]
  %v24 = vld [vmem:[%s0 + $0xc] sm:$0xf]
  %v25 = vld [vmem:[%s0 + $0x10] sm:$0xf]
  %v26 = vld [vmem:[%s0 + $0x14] sm:$0xf]
  %v27 = vld [vmem:[%s1] sm:$0xf]
  %v28 = vld [vmem:[%s1 + $0x4] sm:$0xf]
  %v29 = vld [vmem:[%s1 + $0x8] sm:$0x3]
  %v30 = vld [vmem:[%s2] sm:$0x1]
  %v32 = vlaneseq
  %v33 = vshrl.u32 %v32, 7
  %v34 = vsub.s32 0, %v33
  %v35 = vrot.slane %v30, %v34
  %v43 = vunpack.c.l.b16 %v21
  %v44 = vunpack.c.l.b16 %v22
  %v45 = vunpack.c.l.b16 %v23
  %v46 = vunpack.c.l.b16 %v24
  %v47 = vunpack.c.l.b16 %v25
  %v48 = vunpack.c.l.b16 %v26
  %v49 = vpack.c.b16 %v44, %v43
  %v50 = vpack.c.b16 %v46, %v45
  %v51 = vpack.c.b16 %v48, %v47
  %v55 = vunpack.c.l.b16 %v27
  %v56 = vunpack.c.l.b16 %v28
  %v57 = vunpack.c.l.b16 %v29
  %v58 = vpack.c.b16 %v56, %v55
  %v59 = vpack.c.b16 %v57, %v57
  %vm61 = vcmask 162816
  %v63 = vsel %vm61, %v49, 0
  %v66 = vsel %vm61, %v50, 0
  %v69 = vsel %vm61, %v51, 0
  %vm71 = vcmask 1041408
  %v73 = vsel %vm71, %v59, 0
  %75 = vmatprep.subr.bf16.mxu0 0
  %76 = vmatpush1.bf16.msra.mxu0 %v58
  %77 = vmatprep.subr.bf16.mxu0 0
  %78 = vmatpush1.bf16.msra.mxu0 %v73
  %79 = vmatprep.subr.bf16.mxu0 0
  %80 = vmatpush1.bf16.msra.mxu0 0
  %81 = vmatprep.subr.bf16.mxu0 0
  %82 = vmatpush1.bf16.msra.mxu0 0
  %83 = vmatprep.subr.bf16.mxu0 0
  %84 = vmatpush1.bf16.msra.mxu0 0
  %85 = vmatprep.subr.bf16.mxu0 0
  %86 = vmatpush1.bf16.msra.mxu0 0
  %87 = vmatprep.subr.bf16.mxu0 0
  %88 = vmatpush1.bf16.msra.mxu0 0
  %89 = vmatprep.subr.bf16.mxu0 0
  %90 = vmatpush1.bf16.msra.mxu0 0
  %91 = vmatprep.subr.bf16.mxu0 0
  %92 = vmatpush1.bf16.msra.mxu0 0
  %93 = vmatprep.subr.bf16.mxu0 0
  %94 = vmatpush1.bf16.msra.mxu0 0
  %95 = vmatprep.subr.bf16.mxu0 0
  %96 = vmatpush1.bf16.msra.mxu0 0
  %97 = vmatprep.subr.bf16.mxu0 0
  %98 = vmatpush1.bf16.msra.mxu0 0
  %99 = vmatprep.subr.bf16.mxu0 0
  %100 = vmatpush1.bf16.msra.mxu0 0
  %101 = vmatprep.subr.bf16.mxu0 0
  %102 = vmatpush1.bf16.msra.mxu0 0
  %103 = vmatprep.subr.bf16.mxu0 0
  %104 = vmatpush1.bf16.msra.mxu0 0
  %105 = vmatprep.subr.bf16.mxu0 0
  %106 = vmatpush1.bf16.msra.mxu0 0
  %107 = vmatprep.mubr.bf16.mxu0 0
  %108 = vmatmul.mubr.bf16.gmra.mrb[0].mxu0 %v63
  %v109 = vpop.f32.mrb[0].mxu0
  %v110 = vadd.f32 %v35, %v109
  %v111 = vpop.f32.mrb[0].mxu0
  %v112 = vpop.f32.mrb[0].mxu0
  %v113 = vadd.f32 %v35, %v112
  %v114 = vpop.f32.mrb[0].mxu0
  %115 = vmatprep.mubr.bf16.mxu0 0
  %116 = vmatmul.mubr.bf16.gmra.mrb[0].mxu0 %v66
  %v117 = vpop.f32.mrb[0].mxu0
  %v118 = vadd.f32 %v35, %v117
  %v119 = vpop.f32.mrb[0].mxu0
  %v120 = vpop.f32.mrb[0].mxu0
  %v121 = vadd.f32 %v35, %v120
  %v122 = vpop.f32.mrb[0].mxu0
  %123 = vmatprep.mubr.bf16.mxu0 0
  %124 = vmatmul.mubr.bf16.gmra.mrb[0].mxu0 %v69
  %v125 = vpop.f32.mrb[0].mxu0
  %v126 = vadd.f32 %v35, %v125
  %v127 = vpop.f32.mrb[0].mxu0
  %v128 = vpop.f32.mrb[0].mxu0
  %v129 = vadd.f32 %v35, %v128
  %v130 = vpop.f32.mrb[0].mxu0
  %131 = vdwg.mxu0
  %v132 = vmax.f32 %v110, 0.0
  %v133 = vmax.f32 %v113, 0.0
  %v134 = vmax.f32 %v118, 0.0
  %v135 = vmax.f32 %v121, 0.0
  %v136 = vmax.f32 %v126, 0.0
  %v137 = vmax.f32 %v129, 0.0
  %v138 = vld [vmem:[%s3] sm:$0x1]
  %v139 = vunpack.c.l.bf16 %v138
  %v140 = vld [vmem:[%s4] sm:$0x3]
  %142 = vset.pattern.permute.xlu0 0
  %143 = vperm.xlu0 %142, %v140
  %v144 = vpop.permute.xlu0 %143
  %146 = vmatprep.subr.mxu0 0.0
  %147 = vmatpush1.xpose.msra.mxu0 %v132
  %148 = vmatprep.subr.mxu0 0.0
  %149 = vmatpush1.xpose.msra.mxu0 %v133
  %150 = vmatprep.subr.mxu0 0.0
  %151 = vmatpush1.xpose.msra.mxu0 %v134
  %152 = vmatprep.subr.mxu0 0.0
  %153 = vmatpush1.xpose.msra.mxu0 %v135
  %154 = vmatprep.subr.mxu0 0.0
  %155 = vmatpush1.xpose.msra.mxu0 %v136
  %156 = vmatprep.subr.mxu0 0.0
  %157 = vmatpush1.xpose.msra.mxu0 %v137
  %158 = vmatprep.subr.mxu0 0.0
  %159 = vmatpush1.xpose.msra.mxu0 0.0
  %160 = vmatprep.subr.mxu0 0.0
  %161 = vmatpush1.xpose.msra.mxu0 0.0
  %162 = vmatprep.subr.mxu0 0.0
  %163 = vmatpush1.xpose.msra.mxu0 0.0
  %164 = vmatprep.subr.mxu0 0.0
  %165 = vmatpush1.xpose.msra.mxu0 0.0
  %166 = vmatprep.subr.mxu0 0.0
  %167 = vmatpush1.xpose.msra.mxu0 0.0
  %168 = vmatprep.subr.mxu0 0.0
  %169 = vmatpush1.xpose.msra.mxu0 0.0
  %170 = vmatprep.subr.mxu0 0.0
  %171 = vmatpush1.xpose.msra.mxu0 0.0
  %172 = vmatprep.subr.mxu0 0.0
  %173 = vmatpush1.xpose.msra.mxu0 0.0
  %174 = vmatprep.subr.mxu0 0.0
  %175 = vmatpush1.xpose.msra.mxu0 0.0
  %176 = vmatprep.subr.mxu0 0.0
  %177 = vmatpush1.xpose.msra.mxu0 0.0
  %178 = vmatprep.subr.mxu0 0.0
  %179 = vmatpush1.xpose.msra.mxu0 0.0
  %180 = vmatprep.subr.mxu0 0.0
  %181 = vmatpush1.xpose.msra.mxu0 0.0
  %182 = vmatprep.subr.mxu0 0.0
  %183 = vmatpush1.xpose.msra.mxu0 0.0
  %184 = vmatprep.subr.mxu0 0.0
  %185 = vmatpush1.xpose.msra.mxu0 0.0
  %186 = vmatprep.subr.mxu0 0.0
  %187 = vmatpush1.xpose.msra.mxu0 0.0
  %188 = vmatprep.subr.mxu0 0.0
  %189 = vmatpush1.xpose.msra.mxu0 0.0
  %190 = vmatprep.subr.mxu0 0.0
  %191 = vmatpush1.xpose.msra.mxu0 0.0
  %192 = vmatprep.subr.mxu0 0.0
  %193 = vmatpush1.xpose.msra.mxu0 0.0
  %194 = vmatprep.subr.mxu0 0.0
  %195 = vmatpush1.xpose.msra.mxu0 0.0
  %196 = vmatprep.subr.mxu0 0.0
  %197 = vmatpush1.xpose.msra.mxu0 0.0
  %198 = vmatprep.subr.mxu0 0.0
  %199 = vmatpush1.xpose.msra.mxu0 0.0
  %200 = vmatprep.subr.mxu0 0.0
  %201 = vmatpush1.xpose.msra.mxu0 0.0
  %202 = vmatprep.subr.mxu0 0.0
  %203 = vmatpush1.xpose.msra.mxu0 0.0
  %204 = vmatprep.subr.mxu0 0.0
  %205 = vmatpush1.xpose.msra.mxu0 0.0
  %206 = vmatprep.subr.mxu0 0.0
  %207 = vmatpush1.xpose.msra.mxu0 0.0
  %208 = vmatprep.subr.mxu0 0.0
  %209 = vmatpush1.xpose.msra.mxu0 0.0
  %210 = vmatprep.mubr.f32.mxu0 0.0
  %211 = vmatmul.mubr.f32.gmra.mrb[0].mxu0 %v139
  %v212 = vpop.f32.mrb[0].mxu0
  %v213 = vadd.f32 %v144, %v212
  %v214 = vpop.f32.mrb[0].mxu0
  %215 = vdwg.mxu0
  %vm216 = vcmask 386048
  %217 = vst.msk [vmem:[%s5] sm:$0x3] %vm216, %v213
  // Predicated region
  $region22: #{mlp_forward.1} parent=0 // pred_check
    _
  $region23: #{mlp_forward.1} parent=0 // pred_check_branch
    %219 = sbr.rel (0) target = $region25
  $region24: #{mlp_forward.1} parent=0 // pred_region
    _
  $region25: #{mlp_forward.1} parent=0 // pred_fallthru
    _
  // Predicated region
  $region26: #{mlp_forward.1} parent=0 // pred_check
    _
  $region27: #{mlp_forward.1} parent=0 // pred_check_branch
    %221 = sbr.rel (0) target = $region29
  $region28: #{mlp_forward.1} parent=0 // pred_region
    _
  $region29: #{mlp_forward.1} parent=0 // pred_fallthru
    _

</llo_original>
